<compile_context>
chip_gen: v7x
topology: tpu7x:2x2x1
jax: 0.10.0
libtpu: 0.0.40
codegen_flags: <defaults>
</compile_context>

<pallas_src>
import functools
import math

import jax
import jax.numpy as jnp
from jax import lax
from jax.experimental import pallas as pl
from jax.experimental.pallas import tpu as pltpu

RESTYPES = ['A', 'R', 'N', 'D', 'C', 'Q', 'E', 'G', 'H', 'I', 'L',
            'K', 'M', 'F', 'P', 'S', 'T', 'W', 'Y', 'V', 'X', 'U']

_GELU_C = math.sqrt(2.0 / math.pi)


# ----------------------------------------------------------------------------
# Shared math helpers (pure jnp: used inside kernels AND by the reference)
# ----------------------------------------------------------------------------
def _layer_norm(x, g, b, eps):
    """LayerNorm over the last axis. g, b have shape (1, D)."""
    x = x.astype(jnp.float32)
    m = jnp.mean(x, axis=-1, keepdims=True)
    xc = x - m
    var = jnp.mean(xc * xc, axis=-1, keepdims=True)
    return xc * lax.rsqrt(var + eps) * g.astype(jnp.float32) + b.astype(jnp.float32)


def _gelu(x):
    # tanh approximation. TODO(synk): PyTorch's default GELU is the erf-exact form;
    # the tanh form differs by <1e-3 and keeps the kernel on guaranteed EUP ops.
    return 0.5 * x * (1.0 + jnp.tanh(_GELU_C * (x + 0.044715 * x * x * x)))


def _bf16(x):
    return x.astype(jnp.bfloat16)


def make_positional_encoding_table(d_model, max_len=40000, dtype=jnp.float32):
    """Deterministic sinusoidal table, identical to PositionalEncoding.__init__."""
    position = jnp.arange(max_len, dtype=jnp.float32)[:, None]
    div_term = jnp.exp(jnp.arange(0, d_model, 2, dtype=jnp.float32)
                       * (-math.log(10000.0) / d_model))
    angles = position * div_term
    pe = jnp.zeros((1, max_len, d_model), dtype=jnp.float32)
    pe = pe.at[0, :, 0::2].set(jnp.sin(angles))
    pe = pe.at[0, :, 1::2].set(jnp.cos(angles))
    return pe.astype(dtype)


# ----------------------------------------------------------------------------
# Chip-aware sizing helpers
# ----------------------------------------------------------------------------
def _vmem_capacity_bytes():
    try:
        return int(pltpu.get_tpu_info().vmem_capacity_bytes)
    except Exception:
        return 64 << 20                  # conservative (v7x-sized) fallback


def _vmem_limit_bytes(cap):
    # ~100 MiB on the 128 MiB chips (v5e/v6e), capacity - 8 MiB headroom on v7x.
    return max(32 << 20, min(cap - (8 << 20), 100 << 20))


def _choose_seq_tile(S, bytes_per_row, cap):
    """Largest multiple-of-8 seq tile dividing S whose FULL in-kernel footprint
    (f32 temps + double-buffered I/O, encoded in bytes_per_row) fits a slice of the
    per-chip VMEM budget: bigger tiles on 128 MiB chips, ~2-4 MiB total on v7x."""
    target = max(1 << 20, min(8 << 20, cap // 16))
    max_rows = max(8, target // max(1, bytes_per_row))
    if S <= max_rows:
        return S
    ts = (max_rows // 8) * 8
    while ts >= 8:
        if S % ts == 0:
            return ts
        ts -= 8
    return S


# ----------------------------------------------------------------------------
# Kernels
# ----------------------------------------------------------------------------
def _frontend_kernel(x_ref, pe_ref, g_emb_ref, b_emb_ref, g_in_ref, b_in_ref, o_ref, *, eps):
    """embedding_norm -> (+ positional encoding) -> input_norm, fused (one HBM round trip)."""
    x = x_ref[0].astype(jnp.float32)                              # (TS, D)
    h = _layer_norm(x, g_emb_ref[...], b_emb_ref[...], eps)       # embedding_norm
    # embedding_dropout(0.2), PE dropout(0.1), dropout_in(0.2) are identities at inference.
    # TODO(synk): training-mode dropout would use pltpu.prng_seed + pltpu.prng_random_bits.
    h = h + pe_ref[0].astype(jnp.float32)                         # PositionalEncoding add
    h = _layer_norm(h, g_in_ref[...], b_in_ref[...], eps)         # input_norm
    o_ref[0] = h.astype(o_ref.dtype)


def _encoder_stack_kernel(x_ref, ln1_g_ref, ln1_b_ref,
                          wq_ref, bq_ref, wk_ref, bk_ref, wv_ref, bv_ref,
                          wo_ref, bo_ref, ln2_g_ref, ln2_b_ref,
                          w1_ref, b1f_ref, w2_ref, b2f_ref,
                          o_ref, attn_ref, *, n_head, eps, q_chunk):
    """Whole pre-norm TransformerEncoder stack for one batch row.

    grid = (batch 'parallel', layer 'arbitrary'); the activation lives in the output
    VMEM block across the layer axis; each layer's bf16 weights stream in.
    """
    layer = pl.program_id(1)

    @pl.when(layer == 0)
    def _():
        o_ref[...] = x_ref[...]                  # seed the resident activation

    x = o_ref[0].astype(jnp.float32)             # (S, D)
    S, D = x.shape
    d_head = D // n_head

    # --- pre-norm multi-head self-attention (bf16 MXU matmuls, f32 accumulation) ---
    h = _bf16(_layer_norm(x, ln1_g_ref[0], ln1_b_ref[0], eps))
    # 1/sqrt(d_head) is pre-folded into wq / bq in the wrapper.
    q = jnp.dot(h, wq_ref[0], preferred_element_type=jnp.float32) + bq_ref[0]
    k = jnp.dot(h, wk_ref[0], preferred_element_type=jnp.float32) + bk_ref[0]
    v = jnp.dot(h, wv_ref[0], preferred_element_type=jnp.float32) + bv_ref[0]

    for hd in range(n_head):                     # static unroll over heads
        sl = slice(hd * d_head, (hd + 1) * d_head)
        qh, kh, vh = _bf16(q[:, sl]), _bf16(k[:, sl]), _bf16(v[:, sl])
        for q0 in range(0, S, q_chunk):          # q-chunking caps scores at (q_chunk, S)
            q1 = min(q0 + q_chunk, S)
            s = lax.dot_general(qh[q0:q1], kh, (((1,), (1,)), ((), ())),
                                preferred_element_type=jnp.float32)        # (q1-q0, S)
            s = s - jnp.max(s, axis=-1, keepdims=True)
            p = jnp.exp(s)
            p = p * pl.reciprocal(jnp.sum(p, axis=-1, keepdims=True), approx=True)
            # head-concat buffer (lane slot hd*d_head) -> single K=D out-proj below.
            attn_ref[q0:q1, sl] = jnp.dot(_bf16(p), vh,
                                          preferred_element_type=jnp.float32)
    attn = jnp.dot(_bf16(attn_ref[...]), wo_ref[0],
                   preferred_element_type=jnp.float32) + bo_ref[0]
    x = x + attn

    # --- pre-norm feed-forward (GELU MLP) ---
    h = _bf16(_layer_norm(x, ln2_g_ref[0], ln2_b_ref[0], eps))
    h = jnp.dot(h, w1_ref[0], preferred_element_type=jnp.float32) + b1f_ref[0]
    h = jnp.dot(_bf16(_gelu(h)), w2_ref[0], preferred_element_type=jnp.float32) + b2f_ref[0]
    o_ref[0] = (x + h).astype(o_ref.dtype)


def _output_head_kernel(xt_ref, res_ref, a1_ref, c1_ref, g1_ref, b1_ref,
                        a2_ref, c2_ref, g2_ref, b2_ref, a3_ref, c3_ref, o_ref, *, eps):
    """(transformer out + residual) -> Linear/LN/GELU -> Linear/LN/GELU -> Linear(o_pad)."""
    x = xt_ref[0].astype(jnp.float32) + res_ref[0].astype(jnp.float32)   # fused residual add
    h = jnp.dot(_bf16(x), a1_ref[...], preferred_element_type=jnp.float32) + c1_ref[...]
    h = _gelu(_layer_norm(h, g1_ref[...], b1_ref[...], eps))
    h = jnp.dot(_bf16(h), a2_ref[...], preferred_element_type=jnp.float32) + c2_ref[...]
    h = _gelu(_layer_norm(h, g2_ref[...], b2_ref[...], eps))
    h = jnp.dot(_bf16(h), a3_ref[...], preferred_element_type=jnp.float32) + c3_ref[...]
    o_ref[0] = h.astype(o_ref.dtype)             # lane-dense store (o_pad = multiple of 128)


# ----------------------------------------------------------------------------
# Wrappers (pallas_call plumbing)
# ----------------------------------------------------------------------------
def positional_frontend(x_emb, pe_slice, params, *, seq_tile, vmem_limit):
    B, S, D = x_emb.shape
    assert S % seq_tile == 0
    grid = (S // seq_tile, B)   # batch innermost -> pe tile index constant across batch
    return pl.pallas_call(
        functools.partial(_frontend_kernel, eps=1e-5),
        out_shape=jax.ShapeDtypeStruct((B, S, D), x_emb.dtype),
        grid_spec=pltpu.PrefetchScalarGridSpec(
            num_scalar_prefetch=0,
            grid=grid,
            in_specs=[
                pl.BlockSpec((1, seq_tile, D), lambda s, b: (b, s, 0)),   # x tile
                pl.BlockSpec((1, seq_tile, D), lambda s, b: (0, s, 0)),   # pe (batch-invariant)
                pl.BlockSpec((1, D), lambda s, b: (0, 0)),                # embedding_norm gamma
                pl.BlockSpec((1, D), lambda s, b: (0, 0)),                # embedding_norm beta
                pl.BlockSpec((1, D), lambda s, b: (0, 0)),                # input_norm gamma
                pl.BlockSpec((1, D), lambda s, b: (0, 0)),                # input_norm beta
            ],
            out_specs=pl.BlockSpec((1, seq_tile, D), lambda s, b: (b, s, 0)),
        ),
        compiler_params=pltpu.CompilerParams(
            dimension_semantics=("parallel", "parallel"),
            vmem_limit_bytes=vmem_limit),
    )(x_emb, pe_slice, params["emb_ln_g"], params["emb_ln_b"],
      params["in_ln_g"], params["in_ln_b"])


def _stack_layer_params(layers, *, n_head):
    """Stack per-layer weights on a leading layer axis, split wqkv, fold the attention
    scale into wq/bq, and cast all matmul weights to bf16 (biases / LN params stay f32)."""
    d = layers[0]["wqkv"].shape[0]
    d_head = d // n_head
    scale = 1.0 / math.sqrt(d_head)

    def stack(fn):
        return jnp.stack([fn(lp) for lp in layers], axis=0)

    return {
        "ln1_g": stack(lambda lp: lp["ln1_g"]),
        "ln1_b": stack(lambda lp: lp["ln1_b"]),
        "wq": stack(lambda lp: _bf16(lp["wqkv"][:, :d] * scale)),
        "bq": stack(lambda lp: lp["bqkv"][:, :d] * scale),
        "wk": stack(lambda lp: _bf16(lp["wqkv"][:, d:2 * d])),
        "bk": stack(lambda lp: lp["bqkv"][:, d:2 * d]),
        "wv": stack(lambda lp: _bf16(lp["wqkv"][:, 2 * d:])),
        "bv": stack(lambda lp: lp["bqkv"][:, 2 * d:]),
        "wo": stack(lambda lp: _bf16(lp["wo"])),
        "bo": stack(lambda lp: lp["bo"]),
        "ln2_g": stack(lambda lp: lp["ln2_g"]),
        "ln2_b": stack(lambda lp: lp["ln2_b"]),
        "w1": stack(lambda lp: _bf16(lp["w1"])),
        "b1": stack(lambda lp: lp["b1"]),
        "w2": stack(lambda lp: _bf16(lp["w2"])),
        "b2": stack(lambda lp: lp["b2"]),
    }


def encoder_stack(x, sw, *, n_head, q_chunk, vmem_limit):
    B, S, D = x.shape
    names = ("ln1_g", "ln1_b", "wq", "bq", "wk", "bk", "wv", "bv",
             "wo", "bo", "ln2_g", "ln2_b", "w1", "b1", "w2", "b2")
    weights = [sw[n] for n in names]
    n_layer = weights[2].shape[0]
    # Per-layer weight blocks: index depends only on the layer axis -> default double
    # buffering prefetches layer l+1 weights while layer l computes.
    w_specs = [pl.BlockSpec((1,) + w.shape[1:], lambda b, l: (l, 0, 0)) for w in weights]
    return pl.pallas_call(
        functools.partial(_encoder_stack_kernel, n_head=n_head, eps=1e-6, q_chunk=q_chunk),
        out_shape=jax.ShapeDtypeStruct((B, S, D), x.dtype),
        grid_spec=pltpu.PrefetchScalarGridSpec(
            num_scalar_prefetch=0,
            grid=(B, n_layer),
            in_specs=[pl.BlockSpec((1, S, D), lambda b, l: (b, 0, 0))] + w_specs,
            out_specs=pl.BlockSpec((1, S, D), lambda b, l: (b, 0, 0)),
            scratch_shapes=[pltpu.VMEM((S, D), jnp.float32)],   # head-concat buffer
        ),
        compiler_params=pltpu.CompilerParams(
            dimension_semantics=("parallel", "arbitrary"),
            vmem_limit_bytes=vmem_limit),
    )(x, *weights)


def output_head(x_trans, residual, hp, o_dim, *, seq_tile, vmem_limit):
    B, S, D = x_trans.shape
    assert S % seq_tile == 0
    o_pad = ((o_dim + 127) // 128) * 128
    # Lane-dense final projection: zero-pad a3/c3 to a multiple of 128 output lanes.
    a3 = jnp.zeros((D, o_pad), jnp.bfloat16).at[:, :o_dim].set(_bf16(hp["a3"]))
    c3 = jnp.zeros((1, o_pad), jnp.float32).at[:, :o_dim].set(hp["c3"].astype(jnp.float32))
    weights = (_bf16(hp["a1"]), hp["c1"], hp["g1"], hp["b1"],
               _bf16(hp["a2"]), hp["c2"], hp["g2"], hp["b2"], a3, c3)
    grid = (S // seq_tile, B)

    def build(single_buffer):
        kw = {"pipeline_mode": pl.Buffered(1)} if single_buffer else {}
        w_specs = [pl.BlockSpec(w.shape, lambda s, b: (0, 0), **kw) for w in weights]
        return pl.pallas_call(
            functools.partial(_output_head_kernel, eps=1e-5),
            out_shape=jax.ShapeDtypeStruct((B, S, o_pad), x_trans.dtype),
            grid_spec=pltpu.PrefetchScalarGridSpec(
                num_scalar_prefetch=0,
                grid=grid,
                in_specs=[pl.BlockSpec((1, seq_tile, D), lambda s, b: (b, s, 0)),
                          pl.BlockSpec((1, seq_tile, D), lambda s, b: (b, s, 0))] + w_specs,
                out_specs=pl.BlockSpec((1, seq_tile, o_pad), lambda s, b: (b, s, 0)),
            ),
            compiler_params=pltpu.CompilerParams(
                dimension_semantics=("parallel", "parallel"),
                vmem_limit_bytes=vmem_limit),
        )

    try:
        # Grid-invariant weights: request single buffering to halve their VMEM footprint.
        out = build(True)(x_trans, residual, *weights)
    except Exception:
        out = build(False)(x_trans, residual, *weights)
    return out[..., :o_dim]


def disprot_forward(tokens, params, pe, *, n_head):
    """Full DisProtModel.forward (inference)."""
    # Embedding lookup is a data-dependent row gather -> wrapper-side JAX, not a BlockSpec.
    emb = jnp.take(params["emb"], tokens, axis=0)                 # (B, S, D)
    B, S, D = emb.shape
    pe_slice = pe[:, :S, :].astype(emb.dtype)
    it = emb.dtype.itemsize

    cap = _vmem_capacity_bytes()
    vmem_limit = _vmem_limit_bytes(cap)

    # Frontend footprint/row: x/pe/out double-buffered + ~5 f32 temps.
    front_tile = _choose_seq_tile(S, D * (6 * it + 5 * 4), cap)
    x = positional_frontend(emb, pe_slice, params, seq_tile=front_tile, vmem_limit=vmem_limit)
    residual = x

    stacked = _stack_layer_params(params["layers"], n_head=n_head)
    q_chunk = min(S, 512)       # caps the in-kernel score block at (512, S)
    x = encoder_stack(x, stacked, n_head=n_head, q_chunk=q_chunk, vmem_limit=vmem_limit)

    o_dim = params["head"]["a3"].shape[1]
    o_pad = ((o_dim + 127) // 128) * 128
    # Head footprint/row: x/res in + padded out (double-buffered) + f32 temps incl. 2*D hidden.
    head_tile = _choose_seq_tile(S, D * (4 * it + 8 * 4) + o_pad * (2 * it + 4), cap)
    return output_head(x, residual, params["head"], o_dim,
                       seq_tile=head_tile, vmem_limit=vmem_limit)


# ----------------------------------------------------------------------------
# Parameters + pure-JAX reference
# ----------------------------------------------------------------------------
def init_params(key, d_model, n_layer, o_dim, vocab_size):
    keys = iter(jax.random.split(key, 4 * n_layer + 8))
    f32 = jnp.float32

    def dense(shape, std=0.1):
        return jax.random.normal(next(keys), shape, f32) * std

    def ones(*shape):
        return jnp.ones(shape, f32)

    def zeros(*shape):
        return jnp.zeros(shape, f32)

    d, ff = d_model, 4 * d_model
    params = {
        "emb": dense((vocab_size, d), std=1.0),
        "emb_ln_g": ones(1, d), "emb_ln_b": zeros(1, d),
        "in_ln_g": ones(1, d), "in_ln_b": zeros(1, d),
        "layers": [],
        "head": {
            "a1": dense((d, 2 * d)), "c1": zeros(1, 2 * d),
            "g1": ones(1, 2 * d),    "b1": zeros(1, 2 * d),
            "a2": dense((2 * d, d)), "c2": zeros(1, d),
            "g2": ones(1, d),        "b2": zeros(1, d),
            "a3": dense((d, o_dim)), "c3": zeros(1, o_dim),
        },
    }
    for _ in range(n_layer):
        params["layers"].append({
            "ln1_g": ones(1, d), "ln1_b": zeros(1, d),
            "wqkv": dense((d, 3 * d)), "bqkv": zeros(1, 3 * d),
            "wo": dense((d, d)),       "bo": zeros(1, d),
            "ln2_g": ones(1, d), "ln2_b": zeros(1, d),
            "w1": dense((d, ff)), "b1": zeros(1, ff),
            "w2": dense((ff, d)), "b2": zeros(1, d),
        })
    return params


def reference_forward(tokens, params, pe, *, n_head):
    hi = lax.Precision.HIGHEST
    x = jnp.take(params["emb"], tokens, axis=0)
    x = _layer_norm(x, params["emb_ln_g"], params["emb_ln_b"], 1e-5)
    x = x + pe[:, :x.shape[1], :]
    x = _layer_norm(x, params["in_ln_g"], params["in_ln_b"], 1e-5)
    residual = x
    d_model = x.shape[-1]
    d_head = d_model // n_head
    for lp in params["layers"]:
        h = _layer_norm(x, lp["ln1_g"], lp["ln1_b"], 1e-6)   # layer_norm_eps=1e-6 (spec)
        qkv = jnp.dot(h, lp["wqkv"], precision=hi) + lp["bqkv"]
        q, k, v = qkv[..., :d_model], qkv[..., d_model:2 * d_model], qkv[..., 2 * d_model:]
        heads = []
        for hd in range(n_head):
            sl = slice(hd * d_head, (hd + 1) * d_head)
            s = jnp.einsum("bqd,bkd->bqk", q[..., sl], k[..., sl],
                           precision=hi) / math.sqrt(d_head)
            p = jax.nn.softmax(s, axis=-1)
            heads.append(jnp.einsum("bqk,bkd->bqd", p, v[..., sl], precision=hi))
        attn = jnp.dot(jnp.concatenate(heads, axis=-1), lp["wo"], precision=hi) + lp["bo"]
        x = x + attn
        h = _layer_norm(x, lp["ln2_g"], lp["ln2_b"], 1e-6)
        h = _gelu(jnp.dot(h, lp["w1"], precision=hi) + lp["b1"])
        x = x + jnp.dot(h, lp["w2"], precision=hi) + lp["b2"]
    x = x + residual
    hp = params["head"]
    h = _gelu(_layer_norm(jnp.dot(x, hp["a1"], precision=hi) + hp["c1"],
                          hp["g1"], hp["b1"], 1e-5))
    h = _gelu(_layer_norm(jnp.dot(h, hp["a2"], precision=hi) + hp["c2"],
                          hp["g2"], hp["b2"], 1e-5))
    return jnp.dot(h, hp["a3"], precision=hi) + hp["c3"]


# ----------------------------------------------------------------------------
if __name__ == "__main__":
    B, S = 2, 64
    d_model, n_head, n_layer, o_dim = 32, 4, 2, 2
    vocab_size = len(RESTYPES)   # 22

    key = jax.random.PRNGKey(0)
    k_tok, k_par = jax.random.split(key)
    tokens = jax.random.randint(k_tok, (B, S), 0, vocab_size, dtype=jnp.int32)
    params = init_params(k_par, d_model, n_layer, o_dim, vocab_size)
    pe = make_positional_encoding_table(d_model, max_len=40000)

    out = disprot_forward(tokens, params, pe, n_head=n_head)
    out = jax.block_until_ready(out)

    assert out.shape == (B, S, o_dim)
    assert bool(jnp.all(jnp.isfinite(out)))

    ref = reference_forward(tokens, params, pe, n_head=n_head)
    max_err = float(jnp.max(jnp.abs(out - ref)))
    # Loose tolerance: kernel matmuls run bf16 on the MXU (f32 accumulation) and the softmax
    # denominator uses the approx EUP reciprocal; reference uses f32 HIGHEST-precision dots.
    assert max_err < 2e-1, f"mismatch vs reference: max abs err = {max_err}"

    print("KERNEL_OK")
</pallas_src>

<mosaic_0001>
module attributes {stable_mosaic.version = 11 : i64} {
  func.func @_frontend_kernel(%arg0: i32, %arg1: i32, %arg2: memref<1x64x32xf32, #tpu.memory_space<vmem>>, %arg3: memref<1x64x32xf32, #tpu.memory_space<vmem>>, %arg4: memref<1x32xf32, #tpu.memory_space<vmem>>, %arg5: memref<1x32xf32, #tpu.memory_space<vmem>>, %arg6: memref<1x32xf32, #tpu.memory_space<vmem>>, %arg7: memref<1x32xf32, #tpu.memory_space<vmem>>, %arg8: memref<1x64x32xf32, #tpu.memory_space<vmem>>) attributes {dimension_semantics = [#tpu.dimension_semantics<parallel>, #tpu.dimension_semantics<parallel>], iteration_bounds = array<i64: 1, 2>, scalar_prefetch = 0 : i64, scratch_operands = 0 : i64, tpu.core_type = #tpu.core_type<tc>, window_params = [{transform_indices = @transform_0, window_bounds = array<i64: 1, 64, 32>}, {transform_indices = @transform_1, window_bounds = array<i64: 1, 64, 32>}, {pipeline_mode = #tpu.pipeline_mode<synchronous>, transform_indices = @transform_2, window_bounds = array<i64: 1, 32>}, {pipeline_mode = #tpu.pipeline_mode<synchronous>, transform_indices = @transform_3, window_bounds = array<i64: 1, 32>}, {pipeline_mode = #tpu.pipeline_mode<synchronous>, transform_indices = @transform_4, window_bounds = array<i64: 1, 32>}, {pipeline_mode = #tpu.pipeline_mode<synchronous>, transform_indices = @transform_5, window_bounds = array<i64: 1, 32>}, {transform_indices = @transform_6, window_bounds = array<i64: 1, 64, 32>}]} {
    %c0 = arith.constant 0 : index
    %c0_0 = arith.constant 0 : index
    %c0_1 = arith.constant 0 : index
    %0 = vector.load %arg2[%c0, %c0_0, %c0_1] : memref<1x64x32xf32, #tpu.memory_space<vmem>>, vector<1x64x32xf32>
    %1 = vector.shape_cast %0 : vector<1x64x32xf32> to vector<64x32xf32>
    %c0_2 = arith.constant 0 : index
    %c0_3 = arith.constant 0 : index
    %2 = vector.load %arg4[%c0_2, %c0_3] : memref<1x32xf32, #tpu.memory_space<vmem>>, vector<1x32xf32>
    %c0_4 = arith.constant 0 : index
    %c0_5 = arith.constant 0 : index
    %3 = vector.load %arg5[%c0_4, %c0_5] : memref<1x32xf32, #tpu.memory_space<vmem>>, vector<1x32xf32>
    %cst = arith.constant dense<0.000000e+00> : vector<64xf32>
    %4 = vector.multi_reduction <add>, %1, %cst [1] : vector<64x32xf32> to vector<64xf32>
    %5 = vector.shape_cast %4 : vector<64xf32> to vector<64x1xf32>
    %cst_6 = arith.constant 3.200000e+01 : f32
    %6 = vector.broadcast %cst_6 : f32 to vector<64x1xf32>
    %7 = arith.divf %5, %6 : vector<64x1xf32>
    %8 = vector.broadcast %7 : vector<64x1xf32> to vector<64x32xf32>
    %9 = arith.subf %1, %8 : vector<64x32xf32>
    %10 = arith.mulf %9, %9 : vector<64x32xf32>
    %cst_7 = arith.constant dense<0.000000e+00> : vector<64xf32>
    %11 = vector.multi_reduction <add>, %10, %cst_7 [1] : vector<64x32xf32> to vector<64xf32>
    %12 = vector.shape_cast %11 : vector<64xf32> to vector<64x1xf32>
    %cst_8 = arith.constant 3.200000e+01 : f32
    %13 = vector.broadcast %cst_8 : f32 to vector<64x1xf32>
    %14 = arith.divf %12, %13 : vector<64x1xf32>
    %cst_9 = arith.constant 9.99999974E-6 : f32
    %15 = vector.broadcast %cst_9 : f32 to vector<64x1xf32>
    %16 = arith.addf %14, %15 : vector<64x1xf32>
    %17 = math.rsqrt %16 : vector<64x1xf32>
    %18 = vector.broadcast %17 : vector<64x1xf32> to vector<64x32xf32>
    %19 = arith.mulf %9, %18 : vector<64x32xf32>
    %20 = vector.broadcast %2 : vector<1x32xf32> to vector<64x32xf32>
    %21 = arith.mulf %19, %20 : vector<64x32xf32>
    %22 = vector.broadcast %3 : vector<1x32xf32> to vector<64x32xf32>
    %23 = arith.addf %21, %22 : vector<64x32xf32>
    %c0_10 = arith.constant 0 : index
    %c0_11 = arith.constant 0 : index
    %c0_12 = arith.constant 0 : index
    %24 = vector.load %arg3[%c0_10, %c0_11, %c0_12] : memref<1x64x32xf32, #tpu.memory_space<vmem>>, vector<1x64x32xf32>
    %25 = vector.shape_cast %24 : vector<1x64x32xf32> to vector<64x32xf32>
    %26 = arith.addf %23, %25 : vector<64x32xf32>
    %c0_13 = arith.constant 0 : index
    %c0_14 = arith.constant 0 : index
    %27 = vector.load %arg6[%c0_13, %c0_14] : memref<1x32xf32, #tpu.memory_space<vmem>>, vector<1x32xf32>
    %c0_15 = arith.constant 0 : index
    %c0_16 = arith.constant 0 : index
    %28 = vector.load %arg7[%c0_15, %c0_16] : memref<1x32xf32, #tpu.memory_space<vmem>>, vector<1x32xf32>
    %cst_17 = arith.constant dense<0.000000e+00> : vector<64xf32>
    %29 = vector.multi_reduction <add>, %26, %cst_17 [1] : vector<64x32xf32> to vector<64xf32>
    %30 = vector.shape_cast %29 : vector<64xf32> to vector<64x1xf32>
    %cst_18 = arith.constant 3.200000e+01 : f32
    %31 = vector.broadcast %cst_18 : f32 to vector<64x1xf32>
    %32 = arith.divf %30, %31 : vector<64x1xf32>
    %33 = vector.broadcast %32 : vector<64x1xf32> to vector<64x32xf32>
    %34 = arith.subf %26, %33 : vector<64x32xf32>
    %35 = arith.mulf %34, %34 : vector<64x32xf32>
    %cst_19 = arith.constant dense<0.000000e+00> : vector<64xf32>
    %36 = vector.multi_reduction <add>, %35, %cst_19 [1] : vector<64x32xf32> to vector<64xf32>
    %37 = vector.shape_cast %36 : vector<64xf32> to vector<64x1xf32>
    %cst_20 = arith.constant 3.200000e+01 : f32
    %38 = vector.broadcast %cst_20 : f32 to vector<64x1xf32>
    %39 = arith.divf %37, %38 : vector<64x1xf32>
    %cst_21 = arith.constant 9.99999974E-6 : f32
    %40 = vector.broadcast %cst_21 : f32 to vector<64x1xf32>
    %41 = arith.addf %39, %40 : vector<64x1xf32>
    %42 = math.rsqrt %41 : vector<64x1xf32>
    %43 = vector.broadcast %42 : vector<64x1xf32> to vector<64x32xf32>
    %44 = arith.mulf %34, %43 : vector<64x32xf32>
    %45 = vector.broadcast %27 : vector<1x32xf32> to vector<64x32xf32>
    %46 = arith.mulf %44, %45 : vector<64x32xf32>
    %47 = vector.broadcast %28 : vector<1x32xf32> to vector<64x32xf32>
    %48 = arith.addf %46, %47 : vector<64x32xf32>
    %c0_22 = arith.constant 0 : index
    %c0_23 = arith.constant 0 : index
    %c0_24 = arith.constant 0 : index
    %49 = vector.load %arg8[%c0_22, %c0_23, %c0_24] : memref<1x64x32xf32, #tpu.memory_space<vmem>>, vector<1x64x32xf32>
    %50 = vector.shape_cast %49 : vector<1x64x32xf32> to vector<64x32xf32>
    %51 = vector.shape_cast %48 : vector<64x32xf32> to vector<1x64x32xf32>
    tpu.vector_store %arg8[%c0_22, %c0_23, %c0_24], %51 {strides = array<i32>} : memref<1x64x32xf32, #tpu.memory_space<vmem>>, vector<1x64x32xf32>,
    return
  }
  func.func @transform_0(%arg0: i32, %arg1: i32) -> (i32, i32, i32) {
    %c0_i32 = arith.constant 0 : i32
    %c0_i32_0 = arith.constant 0 : i32
    return %arg1, %arg0, %c0_i32 : i32, i32, i32
  }
  func.func @transform_1(%arg0: i32, %arg1: i32) -> (i32, i32, i32) {
    %c0_i32 = arith.constant 0 : i32
    %c0_i32_0 = arith.constant 0 : i32
    %c0_i32_1 = arith.constant 0 : i32
    return %c0_i32, %arg0, %c0_i32_0 : i32, i32, i32
  }
  func.func @transform_2(%arg0: i32, %arg1: i32) -> (i32, i32) {
    %c0_i32 = arith.constant 0 : i32
    %c0_i32_0 = arith.constant 0 : i32
    %c0_i32_1 = arith.constant 0 : i32
    return %c0_i32, %c0_i32_0 : i32, i32
  }
  func.func @transform_3(%arg0: i32, %arg1: i32) -> (i32, i32) {
    %c0_i32 = arith.constant 0 : i32
    %c0_i32_0 = arith.constant 0 : i32
    %c0_i32_1 = arith.constant 0 : i32
    return %c0_i32, %c0_i32_0 : i32, i32
  }
  func.func @transform_4(%arg0: i32, %arg1: i32) -> (i32, i32) {
    %c0_i32 = arith.constant 0 : i32
    %c0_i32_0 = arith.constant 0 : i32
    %c0_i32_1 = arith.constant 0 : i32
    return %c0_i32, %c0_i32_0 : i32, i32
  }
  func.func @transform_5(%arg0: i32, %arg1: i32) -> (i32, i32) {
    %c0_i32 = arith.constant 0 : i32
    %c0_i32_0 = arith.constant 0 : i32
    %c0_i32_1 = arith.constant 0 : i32
    return %c0_i32, %c0_i32_0 : i32, i32
  }
  func.func @transform_6(%arg0: i32, %arg1: i32) -> (i32, i32, i32) {
    %c0_i32 = arith.constant 0 : i32
    %c0_i32_0 = arith.constant 0 : i32
    return %arg1, %arg0, %c0_i32 : i32, i32, i32
  }
}

</mosaic_0001>

<llo_original>
// kernel: tpu_custom_call.1
$region0: #{tpu_custom_call.1}
  #allocation0 [shape = 'u32[]', space=smem, size = 0x4, offset = 0x4, fixed_abs, tag = 'smem constant byte address 0x4 - core index']
  #allocation1 [shape = 'u32[144,128]{1,0:T(1,128)}', space=vmem, size = 0x12000, scoped, tag = 'internal scratch']
  %s0 = inlined_call_operand.vmem [shape: f32[2,64,32], index: 0, kind: input, shape index: {}]
  %s1 = inlined_call_operand.vmem [shape: f32[1,64,32], index: 1, kind: input, shape index: {}]
  %s2 = inlined_call_operand.vmem [shape: f32[1,32], index: 2, kind: input, shape index: {}]
  %s3 = inlined_call_operand.vmem [shape: f32[1,32], index: 3, kind: input, shape index: {}]
  %s4 = inlined_call_operand.vmem [shape: f32[1,32], index: 4, kind: input, shape index: {}]
  %s5 = inlined_call_operand.vmem [shape: f32[1,32], index: 5, kind: input, shape index: {}]
  %s6 = inlined_call_operand.vmem [shape: f32[2,64,32], index: 6, kind: output, shape index: {}]
  %s7 = sld [smem:[#allocation0]]
  $region57: #{tpu_custom_call.1} parent=0
    _
  %s9 = ssub.s32 1, %s7
  %s10 = scalar_select 0, %s9, %s7
  loop: start=0, step=1, limit=4
  $region2: #{tpu_custom_call.1} parent=0 // loop_pre_header
    _
  $region3: #{tpu_custom_call.1} parent=0 // loop_header
    %s12 = sphi 0, %s16
    %p13 = scmp.ge.s32.totalorder %s12, 4
    %s19 = sphi 0, %s31
    %s20 = sphi 0, %s27
    %s21 = sphi 0, %s19
    %s22 = sphi 0, %s20
    %s23 = sphi 0, %s21
    %s24 = sphi 0, %s22
    %s36 = sphi 0, %s38
    %s39 = sphi 0, %s36
    %s40 = sphi 0, %s39
    %s56 = sphi 0, %s40
    %s62 = sphi 0, %s64
    %s65 = sphi 0, %s62
    %s66 = sphi 0, %s65
    %s82 = sphi 0, %s66
    %s86 = sphi 0, %s86
    %s88 = sphi 0, %s86
    %s89 = sphi 0, %s88
    %s103 = sphi 0, %s89
    %s107 = sphi 0, %s107
    %s109 = sphi 0, %s107
    %s110 = sphi 0, %s109
    %s124 = sphi 0, %s110
    %s128 = sphi 0, %s128
    %s130 = sphi 0, %s128
    %s131 = sphi 0, %s130
    %s145 = sphi 0, %s131
    %s149 = sphi 0, %s149
    %s151 = sphi 0, %s149
    %s152 = sphi 0, %s151
    %s166 = sphi 0, %s152
    %s174 = sphi 0, %s176
    %s177 = sphi 0, %s174
    %s178 = sphi 0, %s177
    %s194 = sphi 0, %s178
  $region4: #{tpu_custom_call.1} parent=0 // loop_header_branch
    %15 = sbr.rel (%p13) target = $region8
  $region5: #{tpu_custom_call.1} parent=0 // loop_body
    %s17 = ssub.s32 %s12, 1
    %s18 = ssub.s32 %s12, 2
    %s25 = sadd.s32 1, %s20
    %p26 = scmp.ge.s32.totalorder %s25, 2
    %s27 = scalar_select %p26, 0, %s25
    %s28 = sadd.s32 1, %s19
    %s29 = scalar_select %p26, %s28, %s19
    %p30 = scmp.ge.s32.totalorder %s29, 1
    %s31 = scalar_select %p30, 0, %s29
    %s32 = ssub.s32 %s20, %s27
    %s33 = ssub.s32 %s19, %s31
    %s34 = sor.u32 %s32, %s33
    %p35 = scmp.eq.s32.totalorder %s34, 0
    %s37 = sadd.s32 %s36, 1
    %s38 = scalar_select %p35, %s36, %s37
    %p41 = pneg %p35
    %p42 = scmp.eq.s32.totalorder %s12, 1
    %p43 = por %p41, %p42
    %p44 = scmp.ne.s32.totalorder %s36, %s39
    %p45 = scmp.eq.s32.totalorder %s12, 0
    %p46 = por %p44, %p45
    %p47 = scmp.ne.s32.totalorder %s36, %s39
    %p48 = scmp.eq.s32.totalorder %s17, 1
    %p49 = por %p47, %p48
    %p50 = scmp.ne.s32.totalorder %s39, %s40
    %p51 = scmp.eq.s32.totalorder %s17, 0
    %p52 = por %p50, %p51
    %p53 = scmp.ne.s32.totalorder %s39, %s40
    %p54 = scmp.eq.s32.totalorder %s18, 1
    %p55 = por %p53, %p54
    %p57 = scmp.ne.s32.totalorder %s40, %s56
    %p58 = scmp.eq.s32.totalorder %s18, 0
    %p59 = por %p57, %p58
    %s60 = ssub.s32 %s19, %s31
    %p61 = scmp.eq.s32.totalorder %s60, 0
    %s63 = sadd.s32 %s62, 1
    %s64 = scalar_select %p61, %s62, %s63
    %p67 = pneg %p61
    %p68 = scmp.eq.s32.totalorder %s12, 1
    %p69 = por %p67, %p68
    %p70 = scmp.ne.s32.totalorder %s62, %s65
    %p71 = scmp.eq.s32.totalorder %s12, 0
    %p72 = por %p70, %p71
    %p73 = scmp.ne.s32.totalorder %s62, %s65
    %p74 = scmp.eq.s32.totalorder %s17, 1
    %p75 = por %p73, %p74
    %p76 = scmp.ne.s32.totalorder %s65, %s66
    %p77 = scmp.eq.s32.totalorder %s17, 0
    %p78 = por %p76, %p77
    %p79 = scmp.ne.s32.totalorder %s65, %s66
    %p80 = scmp.eq.s32.totalorder %s18, 1
    %p81 = por %p79, %p80
    %p83 = scmp.ne.s32.totalorder %s66, %s82
    %p84 = scmp.eq.s32.totalorder %s18, 0
    %p85 = por %p83, %p84
    %s87 = sadd.s32 %s86, 1
    %p90 = scmp.eq.s32.totalorder %s12, 1
    %p91 = scmp.ne.s32.totalorder %s86, %s88
    %p92 = scmp.eq.s32.totalorder %s12, 0
    %p93 = por %p91, %p92
    %p94 = scmp.ne.s32.totalorder %s86, %s88
    %p95 = scmp.eq.s32.totalorder %s17, 1
    %p96 = por %p94, %p95
    %p97 = scmp.ne.s32.totalorder %s88, %s89
    %p98 = scmp.eq.s32.totalorder %s17, 0
    %p99 = por %p97, %p98
    %p100 = scmp.ne.s32.totalorder %s88, %s89
    %p101 = scmp.eq.s32.totalorder %s18, 1
    %p102 = por %p100, %p101
    %p104 = scmp.ne.s32.totalorder %s89, %s103
    %p105 = scmp.eq.s32.totalorder %s18, 0
    %p106 = por %p104, %p105
    %s108 = sadd.s32 %s107, 1
    %p111 = scmp.eq.s32.totalorder %s12, 1
    %p112 = scmp.ne.s32.totalorder %s107, %s109
    %p113 = scmp.eq.s32.totalorder %s12, 0
    %p114 = por %p112, %p113
    %p115 = scmp.ne.s32.totalorder %s107, %s109
    %p116 = scmp.eq.s32.totalorder %s17, 1
    %p117 = por %p115, %p116
    %p118 = scmp.ne.s32.totalorder %s109, %s110
    %p119 = scmp.eq.s32.totalorder %s17, 0
    %p120 = por %p118, %p119
    %p121 = scmp.ne.s32.totalorder %s109, %s110
    %p122 = scmp.eq.s32.totalorder %s18, 1
    %p123 = por %p121, %p122
    %p125 = scmp.ne.s32.totalorder %s110, %s124
    %p126 = scmp.eq.s32.totalorder %s18, 0
    %p127 = por %p125, %p126
    %s129 = sadd.s32 %s128, 1
    %p132 = scmp.eq.s32.totalorder %s12, 1
    %p133 = scmp.ne.s32.totalorder %s128, %s130
    %p134 = scmp.eq.s32.totalorder %s12, 0
    %p135 = por %p133, %p134
    %p136 = scmp.ne.s32.totalorder %s128, %s130
    %p137 = scmp.eq.s32.totalorder %s17, 1
    %p138 = por %p136, %p137
    %p139 = scmp.ne.s32.totalorder %s130, %s131
    %p140 = scmp.eq.s32.totalorder %s17, 0
    %p141 = por %p139, %p140
    %p142 = scmp.ne.s32.totalorder %s130, %s131
    %p143 = scmp.eq.s32.totalorder %s18, 1
    %p144 = por %p142, %p143
    %p146 = scmp.ne.s32.totalorder %s131, %s145
    %p147 = scmp.eq.s32.totalorder %s18, 0
    %p148 = por %p146, %p147
    %s150 = sadd.s32 %s149, 1
    %p153 = scmp.eq.s32.totalorder %s12, 1
    %p154 = scmp.ne.s32.totalorder %s149, %s151
    %p155 = scmp.eq.s32.totalorder %s12, 0
    %p156 = por %p154, %p155
    %p157 = scmp.ne.s32.totalorder %s149, %s151
    %p158 = scmp.eq.s32.totalorder %s17, 1
    %p159 = por %p157, %p158
    %p160 = scmp.ne.s32.totalorder %s151, %s152
    %p161 = scmp.eq.s32.totalorder %s17, 0
    %p162 = por %p160, %p161
    %p163 = scmp.ne.s32.totalorder %s151, %s152
    %p164 = scmp.eq.s32.totalorder %s18, 1
    %p165 = por %p163, %p164
    %p167 = scmp.ne.s32.totalorder %s152, %s166
    %p168 = scmp.eq.s32.totalorder %s18, 0
    %p169 = por %p167, %p168
    %s170 = ssub.s32 %s20, %s27
    %s171 = ssub.s32 %s19, %s31
    %s172 = sor.u32 %s170, %s171
    %p173 = scmp.eq.s32.totalorder %s172, 0
    %s175 = sadd.s32 %s174, 1
    %s176 = scalar_select %p173, %s174, %s175
    %p179 = pneg %p173
    %p180 = scmp.eq.s32.totalorder %s12, 1
    %p181 = por %p179, %p180
    %p182 = scmp.ne.s32.totalorder %s174, %s177
    %p183 = scmp.eq.s32.totalorder %s12, 0
    %p184 = por %p182, %p183
    %p185 = scmp.ne.s32.totalorder %s174, %s177
    %p186 = scmp.eq.s32.totalorder %s17, 1
    %p187 = por %p185, %p186
    %p188 = scmp.ne.s32.totalorder %s177, %s178
    %p189 = scmp.eq.s32.totalorder %s17, 0
    %p190 = por %p188, %p189
    %p191 = scmp.ne.s32.totalorder %s177, %s178
    %p192 = scmp.eq.s32.totalorder %s18, 1
    %p193 = por %p191, %p192
    %p195 = scmp.ne.s32.totalorder %s178, %s194
    %p196 = scmp.eq.s32.totalorder %s18, 0
    %p197 = por %p195, %p196
    %p198 = scmp.le.s32.totalorder 1, %s12
    %p199 = scmp.lt.s32.totalorder %s12, 3
    %p200 = pnand %p198, %p199
    %p201 = pneg %p200
    // Predicated region
    $region9: #{tpu_custom_call.1} parent=5 // pred_check
      _
    $region10: #{tpu_custom_call.1} parent=5 // pred_check_branch
      %203 = sbr.rel (%p200) target = $region12
    $region11: #{tpu_custom_call.1} parent=5 // pred_region
      %s204 = ssub.s32 %s12, 1
      // Predicated region
      $region13: #{tpu_custom_call.1} parent=11 // pred_check
        %p205 = pneg %p78
      $region14: #{tpu_custom_call.1} parent=11 // pred_check_branch
        %207 = sbr.rel (%p205) target = $region16
      $region15: #{tpu_custom_call.1} parent=11 // pred_region
        %s208 = smul.u32 8, %s21
        %p209 = scmp.lt.s32.totalorder %s208, 7
        %s210 = scalar_select %p209, %s208, 7
        %s211 = smul.addr %s210, 8
        %s212 = scalar_lea.vmem %s1, %s211
        %s213 = smul.u32 8, %s21
      $region16: #{tpu_custom_call.1} parent=11 // pred_fallthru
        _
      // Predicated region
      $region17: #{tpu_custom_call.1} parent=11 // pred_check
        %p214 = pneg %p99
      $region18: #{tpu_custom_call.1} parent=11 // pred_check_branch
        %216 = sbr.rel (%p214) target = $region20
      $region19: #{tpu_custom_call.1} parent=11 // pred_region
        _
      $region20: #{tpu_custom_call.1} parent=11 // pred_fallthru
        _
      // Predicated region
      $region21: #{tpu_custom_call.1} parent=11 // pred_check
        %p217 = pneg %p120
      $region22: #{tpu_custom_call.1} parent=11 // pred_check_branch
        %219 = sbr.rel (%p217) target = $region24
      $region23: #{tpu_custom_call.1} parent=11 // pred_region
        _
      $region24: #{tpu_custom_call.1} parent=11 // pred_fallthru
        _
      // Predicated region
      $region25: #{tpu_custom_call.1} parent=11 // pred_check
        %p220 = pneg %p141
      $region26: #{tpu_custom_call.1} parent=11 // pred_check_branch
        %222 = sbr.rel (%p220) target = $region28
      $region27: #{tpu_custom_call.1} parent=11 // pred_region
        _
      $region28: #{tpu_custom_call.1} parent=11 // pred_fallthru
        _
      // Predicated region
      $region29: #{tpu_custom_call.1} parent=11 // pred_check
        %p223 = pneg %p162
      $region30: #{tpu_custom_call.1} parent=11 // pred_check_branch
        %225 = sbr.rel (%p223) target = $region32
      $region31: #{tpu_custom_call.1} parent=11 // pred_region
        _
      $region32: #{tpu_custom_call.1} parent=11 // pred_fallthru
        _
    $region12: #{tpu_custom_call.1} parent=5 // pred_fallthru
      _
    %p226 = scmp.lt.s32.totalorder %s12, 2
    // Predicated region
    $region33: #{tpu_custom_call.1} parent=5 // pred_check
      %p227 = pneg %p226
    $region34: #{tpu_custom_call.1} parent=5 // pred_check_branch
      %229 = sbr.rel (%p227) target = $region36
    $region35: #{tpu_custom_call.1} parent=5 // pred_region
      // Predicated region
      $region37: #{tpu_custom_call.1} parent=35 // pred_check
        %p230 = pneg %p46
      $region38: #{tpu_custom_call.1} parent=35 // pred_check_branch
        %232 = sbr.rel (%p230) target = $region40
      $region39: #{tpu_custom_call.1} parent=35 // pred_region
        %s233 = smul.u32 8, %s19
        %p234 = scmp.lt.s32.totalorder %s20, 1
        %s235 = scalar_select %p234, %s20, 1
        %p236 = scmp.lt.s32.totalorder %s233, 7
        %s237 = scalar_select %p236, %s233, 7
        %s238 = smul.addr %s235, 8
        %s239 = sadd.s32 %s237, %s238
        %s240 = smul.addr %s239, 8
        %s241 = scalar_lea.vmem %s0, %s240
        %s242 = smul.u32 8, %s19
      $region40: #{tpu_custom_call.1} parent=35 // pred_fallthru
        _
    $region36: #{tpu_custom_call.1} parent=5 // pred_fallthru
      _
    %p243 = scmp.le.s32.totalorder 1, %s12
    %p244 = scmp.lt.s32.totalorder %s12, 3
    %p245 = pnand %p243, %p244
    %p246 = pneg %p245
    // Predicated region
    $region41: #{tpu_custom_call.1} parent=5 // pred_check
      _
    $region42: #{tpu_custom_call.1} parent=5 // pred_check_branch
      %248 = sbr.rel (%p245) target = $region44
    $region43: #{tpu_custom_call.1} parent=5 // pred_region
      %s249 = ssub.s32 %s12, 1
      %s250 = smul.u32 8, %s21
      %p251 = scmp.lt.s32.totalorder %s22, 1
      %s252 = scalar_select %p251, %s22, 1
      %p253 = scmp.lt.s32.totalorder %s250, 7
      %s254 = scalar_select %p253, %s250, 7
      %s255 = smul.addr %s252, 8
      %s256 = sadd.s32 %s254, %s255
      %s257 = smul.addr %s256, 8
      %s258 = scalar_lea.vmem %s0, %s257
      %p259 = pneg %p52
      %p260 = pneg %p49
      %s261 = smul.u32 8, %s21
      %p262 = scmp.lt.s32.totalorder %s261, 7
      %s263 = scalar_select %p262, %s261, 7
      %s264 = smul.addr %s263, 8
      %s265 = scalar_lea.vmem %s1, %s264
      %p266 = pneg %p78
      %p267 = pneg %p75
      %p268 = pneg %p99
      %p269 = pneg %p96
      %p270 = pneg %p120
      %p271 = pneg %p117
      %p272 = pneg %p141
      %p273 = pneg %p138
      %p274 = pneg %p162
      %p275 = pneg %p159
      %p276 = pneg %p190
      %p277 = pneg %p187
      %s278 = smul.u32 8, %s21
      %p279 = scmp.lt.s32.totalorder %s22, 1
      %s280 = scalar_select %p279, %s22, 1
      %p281 = scmp.lt.s32.totalorder %s278, 7
      %s282 = scalar_select %p281, %s278, 7
      %s283 = smul.addr %s280, 8
      %s284 = sadd.s32 %s282, %s283
      %s285 = smul.addr %s284, 8
      %s286 = scalar_lea.vmem %s6, %s285
      %s287 = smul.u32 8, %s21
      %p288 = scmp.lt.s32.totalorder %s22, 1
      %s289 = scalar_select %p288, %s22, 1
      %p290 = scmp.lt.s32.totalorder %s287, 7
      %s291 = scalar_select %p290, %s287, 7
      %s292 = smul.addr %s289, 8
      %s293 = sadd.s32 %s291, %s292
      %s294 = smul.addr %s293, 8
      %s295 = scalar_lea.vmem %s0, %s294
      %s296 = smul.u32 8, %s21
      %s297 = smul.u32 8, %s21
      %p298 = scmp.lt.s32.totalorder %s297, 7
      %s299 = scalar_select %p298, %s297, 7
      %s300 = smul.addr %s299, 8
      %s301 = scalar_lea.vmem %s1, %s300
      %s302 = smul.u32 8, %s21
      %s303 = smul.u32 8, %s21
      %p304 = scmp.lt.s32.totalorder %s22, 1
      %s305 = scalar_select %p304, %s22, 1
      %p306 = scmp.lt.s32.totalorder %s303, 7
      %s307 = scalar_select %p306, %s303, 7
      %s308 = smul.addr %s305, 8
      %s309 = sadd.s32 %s307, %s308
      %s310 = smul.addr %s309, 8
      %s311 = scalar_lea.vmem %s6, %s310
      %s312 = smul.u32 8, %s21
      %v313 = vld [vmem:[%s295] sm:$0xff]
      %v314 = vld [vmem:[%s295 + $0x8] sm:$0xff]
      %v315 = vld [vmem:[%s295 + $0x10] sm:$0xff]
      %v316 = vld [vmem:[%s295 + $0x18] sm:$0xff]
      %v317 = vld [vmem:[%s295 + $0x20] sm:$0xff]
      %v318 = vld [vmem:[%s295 + $0x28] sm:$0xff]
      %v319 = vld [vmem:[%s295 + $0x30] sm:$0xff]
      %v320 = vld [vmem:[%s295 + $0x38] sm:$0xff]
      %v321 = vld [vmem:[%s2] sm:$0x1]
      %v322 = vld [vmem:[%s3] sm:$0x1]
      %vm323 = vcmask 261120
      %v324 = vsel %vm323, %v313, 0.0
      %325 = vadd.xlane.f32.xlu0 %v324
      %v326 = vpop.xlane.xlu0 %325
      %v327 = vsel %vm323, %v314, 0.0
      %328 = vadd.xlane.f32.xlu0 %v327
      %v329 = vpop.xlane.xlu0 %328
      %v330 = vsel %vm323, %v315, 0.0
      %331 = vadd.xlane.f32.xlu0 %v330
      %v332 = vpop.xlane.xlu0 %331
      %v333 = vsel %vm323, %v316, 0.0
      %334 = vadd.xlane.f32.xlu0 %v333
      %v335 = vpop.xlane.xlu0 %334
      %v336 = vsel %vm323, %v317, 0.0
      %337 = vadd.xlane.f32.xlu0 %v336
      %v338 = vpop.xlane.xlu0 %337
      %v339 = vsel %vm323, %v318, 0.0
      %340 = vadd.xlane.f32.xlu0 %v339
      %v341 = vpop.xlane.xlu0 %340
      %v342 = vsel %vm323, %v319, 0.0
      %343 = vadd.xlane.f32.xlu0 %v342
      %v344 = vpop.xlane.xlu0 %343
      %v345 = vsel %vm323, %v320, 0.0
      %346 = vadd.xlane.f32.xlu0 %v345
      %v347 = vpop.xlane.xlu0 %346
      %v348 = vrcp.pop 32.0
      %v349 = vmul.f32 %v326, %v348
      %v350 = vmul.f32 %v329, %v348
      %v351 = vmul.f32 %v332, %v348
      %v352 = vmul.f32 %v335, %v348
      %v353 = vmul.f32 %v338, %v348
      %v354 = vmul.f32 %v341, %v348
      %v355 = vmul.f32 %v344, %v348
      %v356 = vmul.f32 %v347, %v348
      %v357 = vsub.f32 %v313, %v349
      %v358 = vsub.f32 %v314, %v350
      %v359 = vsub.f32 %v315, %v351
      %v360 = vsub.f32 %v316, %v352
      %v361 = vsub.f32 %v317, %v353
      %v362 = vsub.f32 %v318, %v354
      %v363 = vsub.f32 %v319, %v355
      %v364 = vsub.f32 %v320, %v356
      %v365 = vmul.f32 %v357, %v357
      %v366 = vmul.f32 %v358, %v358
      %v367 = vmul.f32 %v359, %v359
      %v368 = vmul.f32 %v360, %v360
      %v369 = vmul.f32 %v361, %v361
      %v370 = vmul.f32 %v362, %v362
      %v371 = vmul.f32 %v363, %v363
      %v372 = vmul.f32 %v364, %v364
      %v373 = vsel %vm323, %v365, 0.0
      %374 = vadd.xlane.f32.xlu0 %v373
      %v375 = vpop.xlane.xlu0 %374
      %v376 = vsel %vm323, %v366, 0.0
      %377 = vadd.xlane.f32.xlu0 %v376
      %v378 = vpop.xlane.xlu0 %377
      %v379 = vsel %vm323, %v367, 0.0
      %380 = vadd.xlane.f32.xlu0 %v379
      %v381 = vpop.xlane.xlu0 %380
      %v382 = vsel %vm323, %v368, 0.0
      %383 = vadd.xlane.f32.xlu0 %v382
      %v384 = vpop.xlane.xlu0 %383
      %v385 = vsel %vm323, %v369, 0.0
      %386 = vadd.xlane.f32.xlu0 %v385
      %v387 = vpop.xlane.xlu0 %386
      %v388 = vsel %vm323, %v370, 0.0
      %389 = vadd.xlane.f32.xlu0 %v388
      %v390 = vpop.xlane.xlu0 %389
      %v391 = vsel %vm323, %v371, 0.0
      %392 = vadd.xlane.f32.xlu0 %v391
      %v393 = vpop.xlane.xlu0 %392
      %v394 = vsel %vm323, %v372, 0.0
      %395 = vadd.xlane.f32.xlu0 %v394
      %v396 = vpop.xlane.xlu0 %395
      %v397 = vmul.f32 %v375, %v348
      %v398 = vmul.f32 %v378, %v348
      %v399 = vmul.f32 %v381, %v348
      %v400 = vmul.f32 %v384, %v348
      %v401 = vmul.f32 %v387, %v348
      %v402 = vmul.f32 %v390, %v348
      %v403 = vmul.f32 %v393, %v348
      %v404 = vmul.f32 %v396, %v348
      %v405 = vadd.f32 %v397, 1e-05
      %v406 = vadd.f32 %v398, 1e-05
      %v407 = vadd.f32 %v399, 1e-05
      %v408 = vadd.f32 %v400, 1e-05
      %v409 = vadd.f32 %v401, 1e-05
      %v410 = vadd.f32 %v402, 1e-05
      %v411 = vadd.f32 %v403, 1e-05
      %v412 = vadd.f32 %v404, 1e-05
      %v413 = vrsqrt.pop %v405
      %v414 = vrsqrt.pop %v406
      %v415 = vrsqrt.pop %v407
      %v416 = vrsqrt.pop %v408
      %v417 = vrsqrt.pop %v409
      %v418 = vrsqrt.pop %v410
      %v419 = vrsqrt.pop %v411
      %v420 = vrsqrt.pop %v412
      %v421 = vmul.f32 %v357, %v413
      %v422 = vmul.f32 %v358, %v414
      %v423 = vmul.f32 %v359, %v415
      %v424 = vmul.f32 %v360, %v416
      %v425 = vmul.f32 %v361, %v417
      %v426 = vmul.f32 %v362, %v418
      %v427 = vmul.f32 %v363, %v419
      %v428 = vmul.f32 %v364, %v420
      %v430 = vlaneseq
      %v431 = vshrl.u32 %v430, 7
      %v432 = vsub.s32 0, %v431
      %v433 = vrot.slane %v321, %v432
      %v435 = vmul.f32 %v421, %v433
      %v436 = vmul.f32 %v422, %v433
      %v437 = vmul.f32 %v423, %v433
      %v438 = vmul.f32 %v424, %v433
      %v439 = vmul.f32 %v425, %v433
      %v440 = vmul.f32 %v426, %v433
      %v441 = vmul.f32 %v427, %v433
      %v442 = vmul.f32 %v428, %v433
      %v444 = vlaneseq
      %v445 = vshrl.u32 %v444, 7
      %v446 = vsub.s32 0, %v445
      %v447 = vrot.slane %v322, %v446
      %v449 = vadd.f32 %v435, %v447
      %v450 = vadd.f32 %v436, %v447
      %v451 = vadd.f32 %v437, %v447
      %v452 = vadd.f32 %v438, %v447
      %v453 = vadd.f32 %v439, %v447
      %v454 = vadd.f32 %v440, %v447
      %v455 = vadd.f32 %v441, %v447
      %v456 = vadd.f32 %v442, %v447
      %v457 = vld [vmem:[%s301] sm:$0xff]
      %v458 = vld [vmem:[%s301 + $0x8] sm:$0xff]
      %v459 = vld [vmem:[%s301 + $0x10] sm:$0xff]
      %v460 = vld [vmem:[%s301 + $0x18] sm:$0xff]
      %v461 = vld [vmem:[%s301 + $0x20] sm:$0xff]
      %v462 = vld [vmem:[%s301 + $0x28] sm:$0xff]
      %v463 = vld [vmem:[%s301 + $0x30] sm:$0xff]
      %v464 = vld [vmem:[%s301 + $0x38] sm:$0xff]
      %v465 = vadd.f32 %v449, %v457
      %v466 = vadd.f32 %v450, %v458
      %v467 = vadd.f32 %v451, %v459
      %v468 = vadd.f32 %v452, %v460
      %v469 = vadd.f32 %v453, %v461
      %v470 = vadd.f32 %v454, %v462
      %v471 = vadd.f32 %v455, %v463
      %v472 = vadd.f32 %v456, %v464
      %v473 = vld [vmem:[%s4] sm:$0x1]
      %v474 = vld [vmem:[%s5] sm:$0x1]
      %v475 = vsel %vm323, %v465, 0.0
      %476 = vadd.xlane.f32.xlu0 %v475
      %v477 = vpop.xlane.xlu0 %476
      %v478 = vsel %vm323, %v466, 0.0
      %479 = vadd.xlane.f32.xlu0 %v478
      %v480 = vpop.xlane.xlu0 %479
      %v481 = vsel %vm323, %v467, 0.0
      %482 = vadd.xlane.f32.xlu0 %v481
      %v483 = vpop.xlane.xlu0 %482
      %v484 = vsel %vm323, %v468, 0.0
      %485 = vadd.xlane.f32.xlu0 %v484
      %v486 = vpop.xlane.xlu0 %485
      %v487 = vsel %vm323, %v469, 0.0
      %488 = vadd.xlane.f32.xlu0 %v487
      %v489 = vpop.xlane.xlu0 %488
      %v490 = vsel %vm323, %v470, 0.0
      %491 = vadd.xlane.f32.xlu0 %v490
      %v492 = vpop.xlane.xlu0 %491
      %v493 = vsel %vm323, %v471, 0.0
      %494 = vadd.xlane.f32.xlu0 %v493
      %v495 = vpop.xlane.xlu0 %494
      %v496 = vsel %vm323, %v472, 0.0
      %497 = vadd.xlane.f32.xlu0 %v496
      %v498 = vpop.xlane.xlu0 %497
      %v499 = vmul.f32 %v477, %v348
      %v500 = vmul.f32 %v480, %v348
      %v501 = vmul.f32 %v483, %v348
      %v502 = vmul.f32 %v486, %v348
      %v503 = vmul.f32 %v489, %v348
      %v504 = vmul.f32 %v492, %v348
      %v505 = vmul.f32 %v495, %v348
      %v506 = vmul.f32 %v498, %v348
      %v507 = vsub.f32 %v465, %v499
      %v508 = vsub.f32 %v466, %v500
      %v509 = vsub.f32 %v467, %v501
      %v510 = vsub.f32 %v468, %v502
      %v511 = vsub.f32 %v469, %v503
      %v512 = vsub.f32 %v470, %v504
      %v513 = vsub.f32 %v471, %v505
      %v514 = vsub.f32 %v472, %v506
      %v515 = vmul.f32 %v507, %v507
      %v516 = vmul.f32 %v508, %v508
      %v517 = vmul.f32 %v509, %v509
      %v518 = vmul.f32 %v510, %v510
      %v519 = vmul.f32 %v511, %v511
      %v520 = vmul.f32 %v512, %v512
      %v521 = vmul.f32 %v513, %v513
      %v522 = vmul.f32 %v514, %v514
      %v523 = vsel %vm323, %v515, 0.0
      %524 = vadd.xlane.f32.xlu0 %v523
      %v525 = vpop.xlane.xlu0 %524
      %v526 = vsel %vm323, %v516, 0.0
      %527 = vadd.xlane.f32.xlu0 %v526
      %v528 = vpop.xlane.xlu0 %527
      %v529 = vsel %vm323, %v517, 0.0
      %530 = vadd.xlane.f32.xlu0 %v529
      %v531 = vpop.xlane.xlu0 %530
      %v532 = vsel %vm323, %v518, 0.0
      %533 = vadd.xlane.f32.xlu0 %v532
      %v534 = vpop.xlane.xlu0 %533
      %v535 = vsel %vm323, %v519, 0.0
      %536 = vadd.xlane.f32.xlu0 %v535
      %v537 = vpop.xlane.xlu0 %536
      %v538 = vsel %vm323, %v520, 0.0
      %539 = vadd.xlane.f32.xlu0 %v538
      %v540 = vpop.xlane.xlu0 %539
      %v541 = vsel %vm323, %v521, 0.0
      %542 = vadd.xlane.f32.xlu0 %v541
      %v543 = vpop.xlane.xlu0 %542
      %v544 = vsel %vm323, %v522, 0.0
      %545 = vadd.xlane.f32.xlu0 %v544
      %v546 = vpop.xlane.xlu0 %545
      %v547 = vmul.f32 %v525, %v348
      %v548 = vmul.f32 %v528, %v348
      %v549 = vmul.f32 %v531, %v348
      %v550 = vmul.f32 %v534, %v348
      %v551 = vmul.f32 %v537, %v348
      %v552 = vmul.f32 %v540, %v348
      %v553 = vmul.f32 %v543, %v348
      %v554 = vmul.f32 %v546, %v348
      %v555 = vadd.f32 %v547, 1e-05
      %v556 = vadd.f32 %v548, 1e-05
      %v557 = vadd.f32 %v549, 1e-05
      %v558 = vadd.f32 %v550, 1e-05
      %v559 = vadd.f32 %v551, 1e-05
      %v560 = vadd.f32 %v552, 1e-05
      %v561 = vadd.f32 %v553, 1e-05
      %v562 = vadd.f32 %v554, 1e-05
      %v563 = vrsqrt.pop %v555
      %v564 = vrsqrt.pop %v556
      %v565 = vrsqrt.pop %v557
      %v566 = vrsqrt.pop %v558
      %v567 = vrsqrt.pop %v559
      %v568 = vrsqrt.pop %v560
      %v569 = vrsqrt.pop %v561
      %v570 = vrsqrt.pop %v562
      %v571 = vmul.f32 %v507, %v563
      %v572 = vmul.f32 %v508, %v564
      %v573 = vmul.f32 %v509, %v565
      %v574 = vmul.f32 %v510, %v566
      %v575 = vmul.f32 %v511, %v567
      %v576 = vmul.f32 %v512, %v568
      %v577 = vmul.f32 %v513, %v569
      %v578 = vmul.f32 %v514, %v570
      %v580 = vlaneseq
      %v581 = vshrl.u32 %v580, 7
      %v582 = vsub.s32 0, %v581
      %v583 = vrot.slane %v473, %v582
      %v585 = vmul.f32 %v571, %v583
      %v586 = vmul.f32 %v572, %v583
      %v587 = vmul.f32 %v573, %v583
      %v588 = vmul.f32 %v574, %v583
      %v589 = vmul.f32 %v575, %v583
      %v590 = vmul.f32 %v576, %v583
      %v591 = vmul.f32 %v577, %v583
      %v592 = vmul.f32 %v578, %v583
      %v594 = vlaneseq
      %v595 = vshrl.u32 %v594, 7
      %v596 = vsub.s32 0, %v595
      %v597 = vrot.slane %v474, %v596
      %v599 = vadd.f32 %v585, %v597
      %v600 = vadd.f32 %v586, %v597
      %v601 = vadd.f32 %v587, %v597
      %v602 = vadd.f32 %v588, %v597
      %v603 = vadd.f32 %v589, %v597
      %v604 = vadd.f32 %v590, %v597
      %v605 = vadd.f32 %v591, %v597
      %v606 = vadd.f32 %v592, %v597
      %607 = vst.msk [vmem:[%s311] sm:$0xff] %vm323, %v599
      %608 = vst.msk [vmem:[%s311 + $0x8] sm:$0xff] %vm323, %v600
      %609 = vst.msk [vmem:[%s311 + $0x10] sm:$0xff] %vm323, %v601
      %610 = vst.msk [vmem:[%s311 + $0x18] sm:$0xff] %vm323, %v602
      %611 = vst.msk [vmem:[%s311 + $0x20] sm:$0xff] %vm323, %v603
      %612 = vst.msk [vmem:[%s311 + $0x28] sm:$0xff] %vm323, %v604
      %613 = vst.msk [vmem:[%s311 + $0x30] sm:$0xff] %vm323, %v605
      %614 = vst.msk [vmem:[%s311 + $0x38] sm:$0xff] %vm323, %v606
      %s615 = smul.u32 8, %s21
      %p616 = scmp.lt.s32.totalorder %s22, 1
      %s617 = scalar_select %p616, %s22, 1
      %p618 = scmp.lt.s32.totalorder %s615, 7
      %s619 = scalar_select %p618, %s615, 7
      %s620 = smul.addr %s617, 8
      %s621 = sadd.s32 %s619, %s620
      %s622 = smul.addr %s621, 8
      %s623 = scalar_lea.vmem %s6, %s622
      // Predicated region
      $region45: #{tpu_custom_call.1} parent=43 // pred_check
        %p624 = pneg %p187
      $region46: #{tpu_custom_call.1} parent=43 // pred_check_branch
        %626 = sbr.rel (%p624) target = $region48
      $region47: #{tpu_custom_call.1} parent=43 // pred_region
        %s627 = smul.u32 8, %s21
      $region48: #{tpu_custom_call.1} parent=43 // pred_fallthru
        _
    $region44: #{tpu_custom_call.1} parent=5 // pred_fallthru
      _
    %p628 = scmp.le.s32.totalorder 2, %s12
    // Predicated region
    $region49: #{tpu_custom_call.1} parent=5 // pred_check
      %p629 = pneg %p628
    $region50: #{tpu_custom_call.1} parent=5 // pred_check_branch
      %631 = sbr.rel (%p629) target = $region52
    $region51: #{tpu_custom_call.1} parent=5 // pred_region
      %s632 = ssub.s32 %s12, 2
      // Predicated region
      $region53: #{tpu_custom_call.1} parent=51 // pred_check
        %p633 = pneg %p193
      $region54: #{tpu_custom_call.1} parent=51 // pred_check_branch
        %635 = sbr.rel (%p633) target = $region56
      $region55: #{tpu_custom_call.1} parent=51 // pred_region
        %s636 = smul.u32 8, %s23
        %p637 = scmp.lt.s32.totalorder %s24, 1
        %s638 = scalar_select %p637, %s24, 1
        %p639 = scmp.lt.s32.totalorder %s636, 7
        %s640 = scalar_select %p639, %s636, 7
        %s641 = smul.addr %s638, 8
        %s642 = sadd.s32 %s640, %s641
        %s643 = smul.addr %s642, 8
        %s644 = scalar_lea.vmem %s6, %s643
      $region56: #{tpu_custom_call.1} parent=51 // pred_fallthru
        _
    $region52: #{tpu_custom_call.1} parent=5 // pred_fallthru
      _
  $region6: #{tpu_custom_call.1} parent=0 // loop_footer
    %s16 = sadd.s32 1, %s12
  $region7: #{tpu_custom_call.1} parent=0 // loop_footer_branch
    %11 = sbr.rel target = $region3
  $region8: #{tpu_custom_call.1} parent=0 // loop_exit
    _

</llo_original>
